<compile_context>
chip_gen: v7x
topology: tpu7x:2x2x1
jax: 0.10.0
libtpu: 0.0.40
codegen_flags: <defaults>
</compile_context>

<pallas_src>
import functools

import jax
import jax.numpy as jnp
from jax.experimental import pallas as pl
from jax.experimental.pallas import tpu as pltpu


def _round_up(a: int, b: int) -> int:
    return (a + b - 1) // b * b


# ----------------------------------------------------------------------------
# Fused single-pass kernel: one (row_tile, HW_padded) block per grid step.
# ----------------------------------------------------------------------------
def _instnorm_fused_kernel(x_ref, y_ref, *, hw: int, hw_padded: int, eps: float):
    x = x_ref[...].astype(jnp.float32)
    needs_mask = hw_padded != hw
    if needs_mask:
        lane = jax.lax.broadcasted_iota(jnp.int32, x.shape, 1)
        mask = lane < hw
        x = jnp.where(mask, x, 0.0)

    inv_hw = 1.0 / hw
    s = jnp.sum(x, axis=-1, keepdims=True)
    mean = s * inv_hw
    centered = x - mean
    if needs_mask:
        centered = jnp.where(mask, centered, 0.0)
    var = jnp.sum(centered * centered, axis=-1, keepdims=True) * inv_hw
    inv_std = jax.lax.rsqrt(var + eps)
    y_ref[...] = (centered * inv_std).astype(y_ref.dtype)


# ----------------------------------------------------------------------------
# Chunked two-pass path (for very large H*W): stats kernel + apply kernel.
# ----------------------------------------------------------------------------
def _stats_kernel(x_ref, mean_ref, rstd_ref, sum_sc, sq_sc, *, hw: int, eps: float):
    j = pl.program_id(1)

    @pl.when(j == 0)
    def _():
        sum_sc[...] = jnp.zeros_like(sum_sc)
        sq_sc[...] = jnp.zeros_like(sq_sc)

    x = x_ref[...].astype(jnp.float32)
    # Padded lanes/rows are zero in HBM, so they contribute nothing to the sums.
    sum_sc[...] += jnp.sum(x, axis=-1, keepdims=True)
    sq_sc[...] += jnp.sum(x * x, axis=-1, keepdims=True)

    @pl.when(j == pl.num_programs(1) - 1)
    def _():
        inv_hw = 1.0 / hw
        mean = sum_sc[...] * inv_hw
        var = jnp.maximum(sq_sc[...] * inv_hw - mean * mean, 0.0)
        mean_ref[...] = mean
        rstd_ref[...] = jax.lax.rsqrt(var + eps)


def _apply_kernel(x_ref, mean_ref, rstd_ref, y_ref):
    x = x_ref[...].astype(jnp.float32)
    y_ref[...] = ((x - mean_ref[...]) * rstd_ref[...]).astype(y_ref.dtype)


# ----------------------------------------------------------------------------
# Wrapper
# ----------------------------------------------------------------------------
def instance_norm(
    x: jnp.ndarray,
    eps: float = 1e-5,
    *,
    target_block_bytes: int = 2 * 1024 * 1024,   # ~2 MiB blocks: amortizes per-step overhead
    max_fused_block_bytes: int = 4 * 1024 * 1024,  # above this, use chunked two-pass path
    force_chunked: bool = False,
) -> jnp.ndarray:
    """x: (N, C, H, W) -> instance-normalized (N, C, H, W)."""
    N, C, H, W = x.shape
    HW = H * W
    rows = N * C
    dtype = x.dtype
    itemsize = jnp.dtype(dtype).itemsize
    # Minimum sublane multiple for the block's second-to-last dim (packed dtypes).
    sub = {4: 8, 2: 16, 1: 32}.get(itemsize, 8)

    HWp = _round_up(HW, 128)  # lane-dense last dim
    x2d = x.reshape(rows, HW)

    def _cparams(sem):
        # Stay well under v7x's 64 MiB physical VMEM while allowing big tiles.
        return pltpu.CompilerParams(
            dimension_semantics=sem,
            vmem_limit_bytes=48 * 1024 * 1024,
        )

    use_fused = (not force_chunked) and (HWp * itemsize * sub <= max_fused_block_bytes)

    if use_fused:
        # Row tile: largest multiple of `sub` whose block fits the byte budget.
        rt = max(sub, (target_block_bytes // (HWp * itemsize)) // sub * sub)
        rt = min(rt, _round_up(rows, sub))
        rows_p = _round_up(rows, rt)

        if rows_p != rows or HWp != HW:
            x2d = jnp.pad(x2d, ((0, rows_p - rows), (0, HWp - HW)))

        kernel = functools.partial(
            _instnorm_fused_kernel, hw=HW, hw_padded=HWp, eps=eps
        )
        y2d = pl.pallas_call(
            kernel,
            out_shape=jax.ShapeDtypeStruct((rows_p, HWp), dtype),
            grid_spec=pltpu.PrefetchScalarGridSpec(
                num_scalar_prefetch=0,
                grid=(rows_p // rt,),
                in_specs=[pl.BlockSpec((rt, HWp), lambda i: (i, 0))],
                out_specs=pl.BlockSpec((rt, HWp), lambda i: (i, 0)),
            ),
            compiler_params=_cparams(("parallel",)),
        )(x2d)
    else:
        # Chunked two-pass path: lane axis split into VMEM-sized chunks.
        rt = sub
        ct = min(HWp, max(128, (target_block_bytes // (rt * itemsize)) // 128 * 128))
        HWp = _round_up(HW, ct)
        rows_p = _round_up(rows, rt)

        if rows_p != rows or HWp != HW:
            x2d = jnp.pad(x2d, ((0, rows_p - rows), (0, HWp - HW)))

        grid = (rows_p // rt, HWp // ct)

        stats_kernel = functools.partial(_stats_kernel, hw=HW, eps=eps)
        mean, rstd = pl.pallas_call(
            stats_kernel,
            out_shape=(
                jax.ShapeDtypeStruct((rows_p, 1), jnp.float32),
                jax.ShapeDtypeStruct((rows_p, 1), jnp.float32),
            ),
            grid_spec=pltpu.PrefetchScalarGridSpec(
                num_scalar_prefetch=0,
                grid=grid,
                in_specs=[pl.BlockSpec((rt, ct), lambda i, j: (i, j))],
                out_specs=[
                    pl.BlockSpec((rt, 1), lambda i, j: (i, 0)),
                    pl.BlockSpec((rt, 1), lambda i, j: (i, 0)),
                ],
                scratch_shapes=[
                    pltpu.VMEM((rt, 1), jnp.float32),
                    pltpu.VMEM((rt, 1), jnp.float32),
                ],
            ),
            compiler_params=_cparams(("parallel", "arbitrary")),
        )(x2d)

        y2d = pl.pallas_call(
            _apply_kernel,
            out_shape=jax.ShapeDtypeStruct((rows_p, HWp), dtype),
            grid_spec=pltpu.PrefetchScalarGridSpec(
                num_scalar_prefetch=0,
                grid=grid,
                in_specs=[
                    pl.BlockSpec((rt, ct), lambda i, j: (i, j)),
                    pl.BlockSpec((rt, 1), lambda i, j: (i, 0)),
                    pl.BlockSpec((rt, 1), lambda i, j: (i, 0)),
                ],
                out_specs=pl.BlockSpec((rt, ct), lambda i, j: (i, j)),
            ),
            compiler_params=_cparams(("parallel", "parallel")),
        )(x2d, mean, rstd)

    if rows_p != rows or HWp != HW:
        y2d = y2d[:rows, :HW]
    return y2d.reshape(N, C, H, W)


def instance_norm_ref(x: jnp.ndarray, eps: float = 1e-5) -> jnp.ndarray:
    # Pure-JAX reference for correctness checking (same formula as the Triton spec).
    xf = x.astype(jnp.float32)
    mean = jnp.mean(xf, axis=(2, 3), keepdims=True)
    var = jnp.mean(xf * xf, axis=(2, 3), keepdims=True) - mean * mean
    return ((xf - mean) * jax.lax.rsqrt(var + eps)).astype(x.dtype)


if __name__ == "__main__":
    key = jax.random.PRNGKey(0)
    N, C, H, W = 2, 4, 16, 16  # num_features = C = 4
    x = jax.random.normal(key, (N, C, H, W), dtype=jnp.float32)

    # Fused single-pass path (aligned shapes).
    y = instance_norm(x)
    jax.block_until_ready(y)
    y_ref = instance_norm_ref(x)
    assert y.shape == x.shape and y.dtype == x.dtype
    assert jnp.max(jnp.abs(y - y_ref)) < 1e-4, "fused path mismatch vs reference"

    # Fused path with row/lane padding (rows not a multiple of 8, HW not of 128).
    x2 = jax.random.normal(jax.random.PRNGKey(1), (2, 3, 7, 9), dtype=jnp.float32)
    y2 = instance_norm(x2)
    jax.block_until_ready(y2)
    assert jnp.max(jnp.abs(y2 - instance_norm_ref(x2))) < 1e-4, "padded path mismatch"

    # Chunked two-pass path (forced small chunks to exercise lane-axis accumulation).
    y3 = instance_norm(x, force_chunked=True, target_block_bytes=4096)
    jax.block_until_ready(y3)
    assert jnp.max(jnp.abs(y3 - y_ref)) < 1e-4, "chunked path mismatch"

    print("KERNEL_OK")
</pallas_src>

<mosaic_0001>
module attributes {stable_mosaic.version = 11 : i64} {
  func.func @_instnorm_fused_kernel(%arg0: i32, %arg1: memref<8x256xf32, #tpu.memory_space<vmem>>, %arg2: memref<8x256xf32, #tpu.memory_space<vmem>>) attributes {dimension_semantics = [#tpu.dimension_semantics<parallel>], iteration_bounds = array<i64: 1>, scalar_prefetch = 0 : i64, scratch_operands = 0 : i64, tpu.core_type = #tpu.core_type<tc>, window_params = [{transform_indices = @transform_0, window_bounds = array<i64: 8, 256>}, {transform_indices = @transform_1, window_bounds = array<i64: 8, 256>}]} {
    %c0 = arith.constant 0 : index
    %c0_0 = arith.constant 0 : index
    %0 = vector.load %arg1[%c0, %c0_0] : memref<8x256xf32, #tpu.memory_space<vmem>>, vector<8x256xf32>
    %cst = arith.constant dense<0.000000e+00> : vector<8xf32>
    %1 = vector.multi_reduction <add>, %0, %cst [1] : vector<8x256xf32> to vector<8xf32>
    %2 = vector.shape_cast %1 : vector<8xf32> to vector<8x1xf32>
    %cst_1 = arith.constant 3.906250e-03 : f32
    %3 = vector.broadcast %cst_1 : f32 to vector<8x1xf32>
    %4 = arith.mulf %2, %3 : vector<8x1xf32>
    %5 = vector.broadcast %4 : vector<8x1xf32> to vector<8x256xf32>
    %6 = arith.subf %0, %5 : vector<8x256xf32>
    %7 = arith.mulf %6, %6 : vector<8x256xf32>
    %cst_2 = arith.constant dense<0.000000e+00> : vector<8xf32>
    %8 = vector.multi_reduction <add>, %7, %cst_2 [1] : vector<8x256xf32> to vector<8xf32>
    %9 = vector.shape_cast %8 : vector<8xf32> to vector<8x1xf32>
    %cst_3 = arith.constant 3.906250e-03 : f32
    %10 = vector.broadcast %cst_3 : f32 to vector<8x1xf32>
    %11 = arith.mulf %9, %10 : vector<8x1xf32>
    %cst_4 = arith.constant 9.99999974E-6 : f32
    %12 = vector.broadcast %cst_4 : f32 to vector<8x1xf32>
    %13 = arith.addf %11, %12 : vector<8x1xf32>
    %14 = math.rsqrt %13 : vector<8x1xf32>
    %15 = vector.broadcast %14 : vector<8x1xf32> to vector<8x256xf32>
    %16 = arith.mulf %6, %15 : vector<8x256xf32>
    %c0_5 = arith.constant 0 : index
    %c0_6 = arith.constant 0 : index
    %17 = vector.load %arg2[%c0_5, %c0_6] : memref<8x256xf32, #tpu.memory_space<vmem>>, vector<8x256xf32>
    tpu.vector_store %arg2[%c0_5, %c0_6], %16 {strides = array<i32>} : memref<8x256xf32, #tpu.memory_space<vmem>>, vector<8x256xf32>,
    return
  }
  func.func @transform_0(%arg0: i32) -> (i32, i32) {
    %c0_i32 = arith.constant 0 : i32
    %c0_i32_0 = arith.constant 0 : i32
    return %arg0, %c0_i32 : i32, i32
  }
  func.func @transform_1(%arg0: i32) -> (i32, i32) {
    %c0_i32 = arith.constant 0 : i32
    %c0_i32_0 = arith.constant 0 : i32
    return %arg0, %c0_i32 : i32, i32
  }
}

</mosaic_0001>

<llo_original>
// kernel: tpu_custom_call.1
$region0: #{tpu_custom_call.1}
  #allocation0 [shape = 'u32[]', space=smem, size = 0x4, offset = 0x4, fixed_abs, tag = 'smem constant byte address 0x4 - core index']
  #allocation1 [shape = 'u32[144,128]{1,0:T(1,128)}', space=vmem, size = 0x12000, scoped, tag = 'internal scratch']
  %s0 = inlined_call_operand.hbm [shape: f32[8,256], index: 0, kind: input, shape index: {}]
  %s1 = inlined_call_operand.hbm [shape: f32[8,256], index: 1, kind: output, shape index: {}]
  %s2 = sld [smem:[#allocation0]]
  $region18: #{tpu_custom_call.1} parent=0
    _
  %s4 = ssub.s32 1, %s2
  %s5 = scalar_select 0, %s4, %s2
  $region1: #{tpu_custom_call.1} parent=0
    #allocation2 [shape = 'u8[8192]{0}', space=vmem, size = 0x2000, scoped, tag = 'input window, operand 0, single buffered']
    #allocation3 [shape = 's32[1]{0}', space=sflag, size = 0x4, scoped, tag = 'scoped memory for tpu_custom_call.1']
    #allocation4 [shape = 's32[1]{0}', space=sflag, size = 0x4, scoped, tag = 'scoped memory for tpu_custom_call.1']
    #allocation5 [shape = 'u8[8192]{0}', space=vmem, size = 0x2000, scoped, tag = 'output window, operand 0, single buffered']
    %6 = vsyncpa [#allocation3], 0
    %7 = vsyncpa [#allocation4], 0
    // Predicated region
    $region2: #{tpu_custom_call.1} parent=1 // pred_check
      _
    $region3: #{tpu_custom_call.1} parent=1 // pred_check_branch
      %9 = sbr.rel (0) target = $region5
    $region4: #{tpu_custom_call.1} parent=1 // pred_region
      %s11 = ssub.s32 256, 256
      %12 = vsyncadd [#allocation3], %s11
      %s14 = sshll.u32 [#allocation2], 4
      %s15 = int_to_ptr.vmem [resolvable:$true] %s14
      %17 = dma.hbm_to_vmem [thread:$0]  %s0, 256, %s15, [#allocation3]
    $region5: #{tpu_custom_call.1} parent=1 // pred_fallthru
      _
    // Predicated region
    $region6: #{tpu_custom_call.1} parent=1 // pred_check
      _
    $region7: #{tpu_custom_call.1} parent=1 // pred_check_branch
      %19 = sbr.rel (0) target = $region9
    $region8: #{tpu_custom_call.1} parent=1 // pred_region
      %20 = dma.done [#allocation3], 256
    $region9: #{tpu_custom_call.1} parent=1 // pred_fallthru
      _
    %v21 = vld [vmem:[#allocation2] sm:$0xff]
    %v22 = vld [vmem:[#allocation2 + $0x8] sm:$0xff]
    %v23 = vadd.f32 %v21, %v22
    %24 = vadd.xlane.f32.xlu0 %v23
    %v25 = vpop.xlane.xlu0 %24
    %v26 = vmul.f32 %v25, 0.00390625
    %v27 = vsub.f32 %v21, %v26
    %v28 = vsub.f32 %v22, %v26
    %v29 = vmul.f32 %v27, %v27
    %v30 = vmul.f32 %v28, %v28
    %v31 = vadd.f32 %v29, %v30
    %32 = vadd.xlane.f32.xlu0 %v31
    %v33 = vpop.xlane.xlu0 %32
    %v34 = vmul.f32 %v33, 0.00390625
    %v35 = vadd.f32 %v34, 1e-05
    %v36 = vrsqrt.pop %v35
    %v37 = vmul.f32 %v27, %v36
    %v38 = vmul.f32 %v28, %v36
    %39 = vst [vmem:[#allocation5] sm:$0xff] %v37
    %40 = vst [vmem:[#allocation5 + $0x8] sm:$0xff] %v38
    // Predicated region
    $region10: #{tpu_custom_call.1} parent=1 // pred_check
      _
    $region11: #{tpu_custom_call.1} parent=1 // pred_check_branch
      %42 = sbr.rel (0) target = $region13
    $region12: #{tpu_custom_call.1} parent=1 // pred_region
      %s44 = ssub.s32 256, 256
      %45 = vsyncadd [#allocation4], %s44
      %s47 = sshll.u32 [#allocation5], 4
      %s48 = int_to_ptr.vmem [resolvable:$true] %s47
      %50 = dma.vmem_to_hbm [thread:$0]  %s48, 256, %s1, [#allocation4]
    $region13: #{tpu_custom_call.1} parent=1 // pred_fallthru
      _
    // Predicated region
    $region14: #{tpu_custom_call.1} parent=1 // pred_check
      _
    $region15: #{tpu_custom_call.1} parent=1 // pred_check_branch
      %52 = sbr.rel (0) target = $region17
    $region16: #{tpu_custom_call.1} parent=1 // pred_region
      %53 = dma.done [#allocation4], 256
    $region17: #{tpu_custom_call.1} parent=1 // pred_fallthru
      _
    %54 = vsyncpa [#allocation3], 1
    %55 = vsyncpa [#allocation4], 1

</llo_original>
